<compile_context>
chip_gen: v6e
topology: v6e:2x2x1
jax: 0.10.0
libtpu: 0.0.40
codegen_flags: <defaults>
</compile_context>

<pallas_src>
import functools

import jax
import jax.numpy as jnp
from jax.experimental import pallas as pl
from jax.experimental.pallas import tpu as pltpu

NUM_CLASSES = 6
EPSILON = 1e-6

# Number of 'parallel' splits of the pixel axis.  Gives the v7x dual
# TensorCores independent work regardless of batch size; on single-TC
# v5e/v6e it is just one extra (cheap) grid axis.
PIXEL_SPLITS = 2


def _round_up(x, m):
    return -(-x // m) * m


@functools.lru_cache(maxsize=None)
def _tiling_params():
    """Per-generation (pixel-tile lanes, scoped-VMEM limit bytes)."""
    vmem_bytes = None
    try:
        info = pltpu.get_tpu_info()
        vmem_bytes = getattr(info, "vmem_capacity_bytes", None)
    except Exception:
        vmem_bytes = None
    if vmem_bytes is not None and vmem_bytes >= 96 * 1024 * 1024:
        # v5e / v6e: 128 MiB physical VMEM -> big tiles amortise the fixed
        # ~0.35 us per-grid-step pipeline overhead.
        return 128 * 1024, 64 * 1024 * 1024
    # v7x (64 MiB physical VMEM) or unknown generation: smaller tile,
    # conservative scoped limit.  Working set at 64K lanes is ~20 MiB.
    return 64 * 1024, 48 * 1024 * 1024


def _class_weights():
    """Deterministic weights from the module's __init__ (no checkpoint load)."""
    pixel_freq = jnp.array(
        [0.832818975, 0.0866185198, 0.0177438743,
         0.037364572, 0.000691303678, 0.0247627551],
        dtype=jnp.float32,
    )
    w = jnp.sqrt(1.0 / (pixel_freq + EPSILON))
    w = jnp.minimum(w, 10.0)
    w = w / jnp.sum(w) * NUM_CLASSES
    return w


def _dice_stats_kernel(labels_ref, logits_ref, out_ref):
    """Accumulate per-class [intersection, pred_sum, true_sum] for one
    (pixel-split, batch) pair.

    labels_ref: (1, T) int8   (sentinel NUM_CLASSES marks padded pixels)
    logits_ref: (C, T) float  (classes on sublanes, pixels on lanes)
    out_ref:    (C, 128) f32  resident accumulator; lanes 0/1/2 hold the stats
    """
    step = pl.program_id(2)

    @pl.when(step == 0)
    def _():
        out_ref[...] = jnp.zeros_like(out_ref)

    logits = logits_ref[...].astype(jnp.float32)               # (C, T)
    C, T = logits.shape

    # Numerically stable softmax over the class (sublane) axis.
    m = jnp.max(logits, axis=0, keepdims=True)                 # (1, T)  XLU
    e = jnp.exp(logits - m)                                    # (C, T)  EUP
    s = jnp.sum(e, axis=0, keepdims=True)                      # (1, T)  XLU

    labels = labels_ref[...].astype(jnp.int32)                 # (1, T)
    valid = (labels < NUM_CLASSES).astype(jnp.float32)         # (1, T)

    # EUP reciprocal with the padding mask folded in: padded pixels get p == 0.
    inv = pl.reciprocal(s, approx=True) * valid                # (1, T)
    p = e * inv                                                # (C, T)

    # One-hot mask via broadcasting a tiny (C, 1) iota against the (1, T)
    # labels -- no (C, T) int32 iota materialized.  Cast once, reuse twice.
    class_ids = jax.lax.broadcasted_iota(jnp.int32, (C, 1), 0)
    is_class = (labels == class_ids).astype(jnp.float32)       # (C, T)

    inter = jnp.sum(p * is_class, axis=1, keepdims=True)       # (C, 1)
    psum = jnp.sum(p, axis=1, keepdims=True)                   # (C, 1)
    tsum = jnp.sum(is_class, axis=1, keepdims=True)            # (C, 1)

    # Full-width, unmasked accumulation: stat k lives in lane k of the
    # resident (C, 128) output block -- no concatenate, no masked stores.
    lane = jax.lax.broadcasted_iota(jnp.int32, (C, 128), 1)
    contrib = (jnp.where(lane == 0, inter, 0.0)
               + jnp.where(lane == 1, psum, 0.0)
               + jnp.where(lane == 2, tsum, 0.0))
    out_ref[...] += contrib


def _dice_stats(labels, logits, tile_n, splits, vmem_limit):
    """labels: (B, 1, Np) int8; logits: (B, C, Np) float.

    Np == splits * steps_half * tile_n; returns (splits, B, C, 128) partials.
    """
    B, C, Np = logits.shape
    steps_half = (Np // tile_n) // splits

    def in_map(s, b, i):
        return (b, 0, s * steps_half + i)

    return pl.pallas_call(
        _dice_stats_kernel,
        out_shape=jax.ShapeDtypeStruct((splits, B, C, 128), jnp.float32),
        grid_spec=pltpu.PrefetchScalarGridSpec(
            num_scalar_prefetch=0,
            grid=(splits, B, steps_half),
            in_specs=[
                # split/batch dims squeezed out of the kernel view
                pl.BlockSpec((None, 1, tile_n), in_map),   # labels (int8)
                pl.BlockSpec((None, C, tile_n), in_map),   # logits
            ],
            # per-(split, batch) resident accumulator; reduction axis last
            out_specs=pl.BlockSpec((None, None, C, 128),
                                   lambda s, b, i: (s, b, 0, 0)),
        ),
        compiler_params=pltpu.CompilerParams(
            dimension_semantics=("parallel", "parallel", "arbitrary"),
            vmem_limit_bytes=vmem_limit,
        ),
    )(labels, logits)


@functools.partial(jax.jit, static_argnames=("transfer_dtype",))
def proven_dice_loss(y_pred, y_true, transfer_dtype=None):
    """y_pred: (B, C, H, W) float logits (NCHW, PyTorch convention).
       y_true: (B, H, W) int class labels in [0, NUM_CLASSES).

    transfer_dtype: optional dtype to ship logits to the kernel in
    (e.g. jnp.bfloat16 when the producing model already emits bf16).
    Default None keeps the input dtype -- a standalone cast would be its own
    HBM pass and can lose end-to-end.
    """
    # TODO(synk): genuinely out-of-range labels (== NUM_CLASSES) are silently
    # dropped by the padding sentinel; validate labels upstream if needed.
    B, C, H, W = y_pred.shape
    HW = H * W
    tile_cap, vmem_limit = _tiling_params()

    # Pixel-tile width: multiple of 128, <= per-generation cap, total step
    # count a multiple of PIXEL_SPLITS; padding waste handled by the sentinel.
    steps = max(PIXEL_SPLITS, -(-HW // tile_cap))
    steps = _round_up(steps, PIXEL_SPLITS)
    tile_n = _round_up(-(-HW // steps), 128)
    Np = steps * tile_n
    hw_pad = Np - HW

    # Free reshapes -- no NCHW transpose, no extra HBM pass over the logits.
    logits = y_pred.reshape(B, C, HW)
    # int8 labels: 4x fewer label bytes of DMA than int32 (sentinel 6 fits).
    labels = y_true.reshape(B, 1, HW).astype(jnp.int8)

    if transfer_dtype is not None and logits.dtype != transfer_dtype:
        logits = logits.astype(transfer_dtype)

    if hw_pad:
        logits = jnp.pad(logits, ((0, 0), (0, 0), (0, hw_pad)))
        # sentinel label == NUM_CLASSES -> zero one-hot + zeroed softmax in kernel
        labels = jnp.pad(labels, ((0, 0), (0, 0), (0, hw_pad)),
                         constant_values=NUM_CLASSES)

    stats = _dice_stats(labels, logits, tile_n, PIXEL_SPLITS, vmem_limit)
    stats = jnp.sum(stats, axis=(0, 1))                # (C, 128): sum partials
    inter, psum, tsum = stats[:, 0], stats[:, 1], stats[:, 2]

    dice = (2.0 * inter + EPSILON) / (tsum + psum + EPSILON)   # (C,)
    w = _class_weights()
    weighted = jnp.sum(dice * w) / jnp.sum(w)
    return 1.0 - weighted


def _reference_loss(y_pred, y_true):
    """Pure-JAX reference mirroring the PyTorch forward, for verification."""
    p = jax.nn.softmax(y_pred.astype(jnp.float32), axis=1)            # (B,C,H,W)
    onehot = jax.nn.one_hot(y_true, NUM_CLASSES, dtype=jnp.float32)   # (B,H,W,C)
    onehot = jnp.transpose(onehot, (0, 3, 1, 2))                      # (B,C,H,W)
    inter = jnp.sum(onehot * p, axis=(0, 2, 3))
    union = jnp.sum(onehot, axis=(0, 2, 3)) + jnp.sum(p, axis=(0, 2, 3))
    dice = (2.0 * inter + EPSILON) / (union + EPSILON)
    w = _class_weights()
    return 1.0 - jnp.sum(dice * w) / jnp.sum(w)


if __name__ == "__main__":
    key = jax.random.PRNGKey(0)
    k1, k2 = jax.random.split(key)

    B, C, H, W = 2, NUM_CLASSES, 16, 16
    y_pred = jax.random.normal(k1, (B, C, H, W), dtype=jnp.float32)
    y_true = jax.random.randint(k2, (B, H, W), 0, NUM_CLASSES, dtype=jnp.int32)

    ref_f32 = jax.block_until_ready(_reference_loss(y_pred, y_true))

    # Default path: logits shipped in their native f32; only approx-reciprocal
    # / reduction-order differences vs the reference.
    loss_f32 = jax.block_until_ready(proven_dice_loss(y_pred, y_true))
    assert jnp.allclose(loss_f32, ref_f32, rtol=2e-3, atol=2e-3), (loss_f32, ref_f32)

    # Opt-in bf16 transfer path (looser tolerance vs the f32 reference; tight
    # tolerance vs a bf16-quantized reference).
    loss_bf16 = jax.block_until_ready(
        proven_dice_loss(y_pred, y_true, transfer_dtype=jnp.bfloat16))
    ref_bf16 = jax.block_until_ready(
        _reference_loss(y_pred.astype(jnp.bfloat16).astype(jnp.float32), y_true))
    assert jnp.allclose(loss_bf16, ref_bf16, rtol=2e-3, atol=2e-3), (loss_bf16, ref_bf16)
    assert jnp.allclose(loss_bf16, ref_f32, rtol=1e-2, atol=1e-2), (loss_bf16, ref_f32)

    print("KERNEL_OK")
</pallas_src>

<mosaic_0001>
module attributes {stable_mosaic.version = 11 : i64} {
  func.func @_dice_stats_kernel(%arg0: i32, %arg1: i32, %arg2: i32, %arg3: memref<1x1x128xi8, #tpu.memory_space<vmem>>, %arg4: memref<1x6x128xf32, #tpu.memory_space<vmem>>, %arg5: memref<1x1x6x128xf32, #tpu.memory_space<vmem>>) attributes {dimension_semantics = [#tpu.dimension_semantics<parallel>, #tpu.dimension_semantics<parallel>, #tpu.dimension_semantics<arbitrary>], iteration_bounds = array<i64: 2, 2, 1>, scalar_prefetch = 0 : i64, scratch_operands = 0 : i64, tpu.core_type = #tpu.core_type<tc>, window_params = [{transform_indices = @transform_0, window_bounds = array<i64: 1, 1, 128>}, {transform_indices = @transform_1, window_bounds = array<i64: 1, 6, 128>}, {transform_indices = @transform_2, window_bounds = array<i64: 1, 1, 6, 128>}]} {
    %c0_i32 = arith.constant 0 : i32
    %0 = arith.cmpi eq, %arg2, %c0_i32 : i32
    %1 = arith.extui %0 : i1 to i32
    %c0_i32_0 = arith.constant 0 : i32
    %2 = arith.cmpi ne, %1, %c0_i32_0 : i32
    scf.if %2 {
      %cst_22 = arith.constant 0.000000e+00 : f32
      %63 = vector.broadcast %cst_22 : f32 to vector<6x128xf32>
      %c0_23 = arith.constant 0 : index
      %c0_24 = arith.constant 0 : index
      %c0_25 = arith.constant 0 : index
      %c0_26 = arith.constant 0 : index
      %64 = vector.load %arg5[%c0_23, %c0_24, %c0_25, %c0_26] : memref<1x1x6x128xf32, #tpu.memory_space<vmem>>, vector<1x1x6x128xf32>
      %65 = vector.shape_cast %64 : vector<1x1x6x128xf32> to vector<6x128xf32>
      %66 = vector.shape_cast %63 : vector<6x128xf32> to vector<1x1x6x128xf32>
      tpu.vector_store %arg5[%c0_23, %c0_24, %c0_25, %c0_26], %66 {strides = array<i32>} : memref<1x1x6x128xf32, #tpu.memory_space<vmem>>, vector<1x1x6x128xf32>,
    } else {
    }
    %c0 = arith.constant 0 : index
    %c0_1 = arith.constant 0 : index
    %c0_2 = arith.constant 0 : index
    %3 = vector.load %arg4[%c0, %c0_1, %c0_2] : memref<1x6x128xf32, #tpu.memory_space<vmem>>, vector<1x6x128xf32>
    %4 = vector.shape_cast %3 : vector<1x6x128xf32> to vector<6x128xf32>
    %cst = arith.constant dense<0xFF800000> : vector<128xf32>
    %5 = vector.multi_reduction <maximumf>, %4, %cst [0] : vector<6x128xf32> to vector<128xf32>
    %6 = vector.shape_cast %5 : vector<128xf32> to vector<1x128xf32>
    %7 = vector.broadcast %6 : vector<1x128xf32> to vector<6x128xf32>
    %8 = arith.subf %4, %7 : vector<6x128xf32>
    %9 = math.exp %8 : vector<6x128xf32>
    %cst_3 = arith.constant dense<0.000000e+00> : vector<128xf32>
    %10 = vector.multi_reduction <add>, %9, %cst_3 [0] : vector<6x128xf32> to vector<128xf32>
    %11 = vector.shape_cast %10 : vector<128xf32> to vector<1x128xf32>
    %c0_4 = arith.constant 0 : index
    %c0_5 = arith.constant 0 : index
    %c0_6 = arith.constant 0 : index
    %12 = vector.load %arg3[%c0_4, %c0_5, %c0_6] : memref<1x1x128xi8, #tpu.memory_space<vmem>>, vector<1x1x128xi8>
    %13 = vector.shape_cast %12 : vector<1x1x128xi8> to vector<1x128xi8>
    %14 = arith.extsi %13 : vector<1x128xi8> to vector<1x128xi32>
    %c6_i32 = arith.constant 6 : i32
    %15 = vector.broadcast %c6_i32 : i32 to vector<1x128xi32>
    %16 = arith.cmpi slt, %14, %15 : vector<1x128xi32>
    %17 = arith.extui %16 : vector<1x128xi1> to vector<1x128xi32>
    %18 = arith.sitofp %17 : vector<1x128xi32> to vector<1x128xf32>
    %19 = tpu.reciprocal %11 {approx = true} : vector<1x128xf32> -> vector<1x128xf32>
    %20 = arith.mulf %19, %18 : vector<1x128xf32>
    %21 = vector.broadcast %20 : vector<1x128xf32> to vector<6x128xf32>
    %22 = arith.mulf %9, %21 : vector<6x128xf32>
    %23 = tpu.iota {dimensions = array<i32: 0>} : vector<6x1xi32>
    %24 = vector.broadcast %14 : vector<1x128xi32> to vector<6x128xi32>
    %25 = vector.broadcast %23 : vector<6x1xi32> to vector<6x128xi32>
    %26 = arith.cmpi eq, %24, %25 : vector<6x128xi32>
    %27 = arith.extui %26 : vector<6x128xi1> to vector<6x128xi32>
    %28 = arith.sitofp %27 : vector<6x128xi32> to vector<6x128xf32>
    %29 = arith.mulf %22, %28 : vector<6x128xf32>
    %cst_7 = arith.constant dense<0.000000e+00> : vector<6xf32>
    %30 = vector.multi_reduction <add>, %29, %cst_7 [1] : vector<6x128xf32> to vector<6xf32>
    %31 = vector.shape_cast %30 : vector<6xf32> to vector<6x1xf32>
    %cst_8 = arith.constant dense<0.000000e+00> : vector<6xf32>
    %32 = vector.multi_reduction <add>, %22, %cst_8 [1] : vector<6x128xf32> to vector<6xf32>
    %33 = vector.shape_cast %32 : vector<6xf32> to vector<6x1xf32>
    %cst_9 = arith.constant dense<0.000000e+00> : vector<6xf32>
    %34 = vector.multi_reduction <add>, %28, %cst_9 [1] : vector<6x128xf32> to vector<6xf32>
    %35 = vector.shape_cast %34 : vector<6xf32> to vector<6x1xf32>
    %36 = tpu.iota {dimensions = array<i32: 1>} : vector<6x128xi32>
    %c0_i32_10 = arith.constant 0 : i32
    %37 = vector.broadcast %c0_i32_10 : i32 to vector<6x128xi32>
    %38 = arith.cmpi eq, %36, %37 : vector<6x128xi32>
    %cst_11 = arith.constant 0.000000e+00 : f32
    %39 = vector.shape_cast %31 : vector<6x1xf32> to vector<6x1xf32>
    %40 = vector.broadcast %39 : vector<6x1xf32> to vector<6x128xf32>
    %41 = vector.broadcast %cst_11 : f32 to vector<6x128xf32>
    %42 = arith.select %38, %40, %41 : vector<6x128xi1>, vector<6x128xf32>
    %c1_i32 = arith.constant 1 : i32
    %43 = vector.broadcast %c1_i32 : i32 to vector<6x128xi32>
    %44 = arith.cmpi eq, %36, %43 : vector<6x128xi32>
    %cst_12 = arith.constant 0.000000e+00 : f32
    %45 = vector.shape_cast %33 : vector<6x1xf32> to vector<6x1xf32>
    %46 = vector.broadcast %45 : vector<6x1xf32> to vector<6x128xf32>
    %47 = vector.broadcast %cst_12 : f32 to vector<6x128xf32>
    %48 = arith.select %44, %46, %47 : vector<6x128xi1>, vector<6x128xf32>
    %49 = arith.addf %42, %48 : vector<6x128xf32>
    %c2_i32 = arith.constant 2 : i32
    %50 = vector.broadcast %c2_i32 : i32 to vector<6x128xi32>
    %51 = arith.cmpi eq, %36, %50 : vector<6x128xi32>
    %cst_13 = arith.constant 0.000000e+00 : f32
    %52 = vector.shape_cast %35 : vector<6x1xf32> to vector<6x1xf32>
    %53 = vector.broadcast %52 : vector<6x1xf32> to vector<6x128xf32>
    %54 = vector.broadcast %cst_13 : f32 to vector<6x128xf32>
    %55 = arith.select %51, %53, %54 : vector<6x128xi1>, vector<6x128xf32>
    %56 = arith.addf %49, %55 : vector<6x128xf32>
    %c0_14 = arith.constant 0 : index
    %c0_15 = arith.constant 0 : index
    %c0_16 = arith.constant 0 : index
    %c0_17 = arith.constant 0 : index
    %57 = vector.load %arg5[%c0_14, %c0_15, %c0_16, %c0_17] : memref<1x1x6x128xf32, #tpu.memory_space<vmem>>, vector<1x1x6x128xf32>
    %58 = vector.shape_cast %57 : vector<1x1x6x128xf32> to vector<6x128xf32>
    %59 = arith.addf %58, %56 : vector<6x128xf32>
    %c0_18 = arith.constant 0 : index
    %c0_19 = arith.constant 0 : index
    %c0_20 = arith.constant 0 : index
    %c0_21 = arith.constant 0 : index
    %60 = vector.load %arg5[%c0_18, %c0_19, %c0_20, %c0_21] : memref<1x1x6x128xf32, #tpu.memory_space<vmem>>, vector<1x1x6x128xf32>
    %61 = vector.shape_cast %60 : vector<1x1x6x128xf32> to vector<6x128xf32>
    %62 = vector.shape_cast %59 : vector<6x128xf32> to vector<1x1x6x128xf32>
    tpu.vector_store %arg5[%c0_18, %c0_19, %c0_20, %c0_21], %62 {strides = array<i32>} : memref<1x1x6x128xf32, #tpu.memory_space<vmem>>, vector<1x1x6x128xf32>,
    return
  }
  func.func @transform_0(%arg0: i32, %arg1: i32, %arg2: i32) -> (i32, i32, i32) {
    %c1_i32 = arith.constant 1 : i32
    %0 = arith.muli %arg0, %c1_i32 : i32
    %1 = arith.addi %0, %arg2 : i32
    %c0_i32 = arith.constant 0 : i32
    %c0_i32_0 = arith.constant 0 : i32
    return %arg1, %c0_i32, %1 : i32, i32, i32
  }
  func.func @transform_1(%arg0: i32, %arg1: i32, %arg2: i32) -> (i32, i32, i32) {
    %c1_i32 = arith.constant 1 : i32
    %0 = arith.muli %arg0, %c1_i32 : i32
    %1 = arith.addi %0, %arg2 : i32
    %c0_i32 = arith.constant 0 : i32
    %c0_i32_0 = arith.constant 0 : i32
    return %arg1, %c0_i32, %1 : i32, i32, i32
  }
  func.func @transform_2(%arg0: i32, %arg1: i32, %arg2: i32) -> (i32, i32, i32, i32) {
    %c0_i32 = arith.constant 0 : i32
    %c0_i32_0 = arith.constant 0 : i32
    %c0_i32_1 = arith.constant 0 : i32
    return %arg0, %arg1, %c0_i32, %c0_i32_0 : i32, i32, i32, i32
  }
}

</mosaic_0001>

<llo_original>
// kernel: proven_dice_loss.1
$region0: #{proven_dice_loss.1}
  #allocation0 [shape = 'u32[]', space=smem, size = 0x4, offset = 0x4, fixed_abs, tag = 'smem constant byte address 0x4 - core index']
  #allocation1 [shape = 'u32[144,128]{1,0:T(1,128)}', space=vmem, size = 0x12000, scoped, tag = 'internal scratch']
  %s0 = inlined_call_operand.vmem [shape: s8[2,1,256], index: 0, kind: input, shape index: {}]
  %s1 = inlined_call_operand.vmem [shape: f32[2,6,256], index: 1, kind: input, shape index: {}]
  %s2 = inlined_call_operand.vmem [shape: f32[2,2,6,128], index: 2, kind: output, shape index: {}]
  %s3 = sld [smem:[#allocation0]]
  $region45: #{proven_dice_loss.1} parent=0
    _
  %s5 = ssub.s32 1, %s3
  %s6 = scalar_select 0, %s5, %s3
  loop: start=0, step=1, limit=6
  $region2: #{proven_dice_loss.1} parent=0 // loop_pre_header
    _
  $region3: #{proven_dice_loss.1} parent=0 // loop_header
    %s8 = sphi 0, %s12
    %p9 = scmp.ge.s32.totalorder %s8, 6
    %s15 = sphi 0, %s34
    %s16 = sphi 0, %s30
    %s17 = sphi 0, %s26
    %s18 = sphi 0, %s15
    %s19 = sphi 0, %s16
    %s20 = sphi 0, %s17
    %s21 = sphi 0, %s18
    %s22 = sphi 0, %s19
    %s23 = sphi 0, %s20
    %s41 = sphi 0, %s43
    %s44 = sphi 0, %s41
    %s45 = sphi 0, %s44
    %s61 = sphi 0, %s45
    %s71 = sphi 0, %s73
    %s74 = sphi 0, %s71
    %s75 = sphi 0, %s74
    %s91 = sphi 0, %s75
    %s99 = sphi 0, %s101
    %s102 = sphi 0, %s99
    %s103 = sphi 0, %s102
    %s119 = sphi 0, %s103
  $region4: #{proven_dice_loss.1} parent=0 // loop_header_branch
    %11 = sbr.rel (%p9) target = $region8
  $region5: #{proven_dice_loss.1} parent=0 // loop_body
    %s13 = ssub.s32 %s8, 1
    %s14 = ssub.s32 %s8, 2
    %s24 = sadd.s32 1, %s17
    %p25 = scmp.ge.s32.totalorder %s24, 1
    %s26 = scalar_select %p25, 0, %s24
    %s27 = sadd.s32 1, %s16
    %s28 = scalar_select %p25, %s27, %s16
    %p29 = scmp.ge.s32.totalorder %s28, 2
    %s30 = scalar_select %p29, 0, %s28
    %s31 = sadd.s32 1, %s15
    %s32 = scalar_select %p29, %s31, %s15
    %p33 = scmp.ge.s32.totalorder %s32, 2
    %s34 = scalar_select %p33, 0, %s32
    %s35 = sadd.s32 %s15, %s17
    %s36 = sadd.s32 %s34, %s26
    %s37 = ssub.s32 %s16, %s30
    %s38 = ssub.s32 %s35, %s36
    %s39 = sor.u32 %s37, %s38
    %p40 = scmp.eq.s32.totalorder %s39, 0
    %s42 = sadd.s32 %s41, 1
    %s43 = scalar_select %p40, %s41, %s42
    %p46 = pneg %p40
    %p47 = scmp.eq.s32.totalorder %s8, 3
    %p48 = por %p46, %p47
    %p49 = scmp.ne.s32.totalorder %s41, %s44
    %p50 = scmp.eq.s32.totalorder %s8, 0
    %p51 = por %p49, %p50
    %p52 = scmp.ne.s32.totalorder %s41, %s44
    %p53 = scmp.eq.s32.totalorder %s13, 3
    %p54 = por %p52, %p53
    %p55 = scmp.ne.s32.totalorder %s44, %s45
    %p56 = scmp.eq.s32.totalorder %s13, 0
    %p57 = por %p55, %p56
    %p58 = scmp.ne.s32.totalorder %s44, %s45
    %p59 = scmp.eq.s32.totalorder %s14, 3
    %p60 = por %p58, %p59
    %p62 = scmp.ne.s32.totalorder %s45, %s61
    %p63 = scmp.eq.s32.totalorder %s14, 0
    %p64 = por %p62, %p63
    %s65 = sadd.s32 %s15, %s17
    %s66 = sadd.s32 %s34, %s26
    %s67 = ssub.s32 %s16, %s30
    %s68 = ssub.s32 %s65, %s66
    %s69 = sor.u32 %s67, %s68
    %p70 = scmp.eq.s32.totalorder %s69, 0
    %s72 = sadd.s32 %s71, 1
    %s73 = scalar_select %p70, %s71, %s72
    %p76 = pneg %p70
    %p77 = scmp.eq.s32.totalorder %s8, 3
    %p78 = por %p76, %p77
    %p79 = scmp.ne.s32.totalorder %s71, %s74
    %p80 = scmp.eq.s32.totalorder %s8, 0
    %p81 = por %p79, %p80
    %p82 = scmp.ne.s32.totalorder %s71, %s74
    %p83 = scmp.eq.s32.totalorder %s13, 3
    %p84 = por %p82, %p83
    %p85 = scmp.ne.s32.totalorder %s74, %s75
    %p86 = scmp.eq.s32.totalorder %s13, 0
    %p87 = por %p85, %p86
    %p88 = scmp.ne.s32.totalorder %s74, %s75
    %p89 = scmp.eq.s32.totalorder %s14, 3
    %p90 = por %p88, %p89
    %p92 = scmp.ne.s32.totalorder %s75, %s91
    %p93 = scmp.eq.s32.totalorder %s14, 0
    %p94 = por %p92, %p93
    %s95 = ssub.s32 %s15, %s34
    %s96 = ssub.s32 %s16, %s30
    %s97 = sor.u32 %s95, %s96
    %p98 = scmp.eq.s32.totalorder %s97, 0
    %s100 = sadd.s32 %s99, 1
    %s101 = scalar_select %p98, %s99, %s100
    %p104 = pneg %p98
    %p105 = scmp.eq.s32.totalorder %s8, 3
    %p106 = por %p104, %p105
    %p107 = scmp.ne.s32.totalorder %s99, %s102
    %p108 = scmp.eq.s32.totalorder %s8, 0
    %p109 = por %p107, %p108
    %p110 = scmp.ne.s32.totalorder %s99, %s102
    %p111 = scmp.eq.s32.totalorder %s13, 3
    %p112 = por %p110, %p111
    %p113 = scmp.ne.s32.totalorder %s102, %s103
    %p114 = scmp.eq.s32.totalorder %s13, 0
    %p115 = por %p113, %p114
    %p116 = scmp.ne.s32.totalorder %s102, %s103
    %p117 = scmp.eq.s32.totalorder %s14, 3
    %p118 = por %p116, %p117
    %p120 = scmp.ne.s32.totalorder %s103, %s119
    %p121 = scmp.eq.s32.totalorder %s14, 0
    %p122 = por %p120, %p121
    %p123 = scmp.le.s32.totalorder 1, %s8
    %p124 = scmp.lt.s32.totalorder %s8, 5
    %p125 = pnand %p123, %p124
    %p126 = pneg %p125
    // Predicated region
    $region9: #{proven_dice_loss.1} parent=5 // pred_check
      _
    $region10: #{proven_dice_loss.1} parent=5 // pred_check_branch
      %128 = sbr.rel (%p125) target = $region12
    $region11: #{proven_dice_loss.1} parent=5 // pred_region
      %s129 = ssub.s32 %s8, 1
    $region12: #{proven_dice_loss.1} parent=5 // pred_fallthru
      _
    %p130 = scmp.lt.s32.totalorder %s8, 4
    // Predicated region
    $region13: #{proven_dice_loss.1} parent=5 // pred_check
      %p131 = pneg %p130
    $region14: #{proven_dice_loss.1} parent=5 // pred_check_branch
      %133 = sbr.rel (%p131) target = $region16
    $region15: #{proven_dice_loss.1} parent=5 // pred_region
      // Predicated region
      $region17: #{proven_dice_loss.1} parent=15 // pred_check
        %p134 = pneg %p51
      $region18: #{proven_dice_loss.1} parent=15 // pred_check_branch
        %136 = sbr.rel (%p134) target = $region20
      $region19: #{proven_dice_loss.1} parent=15 // pred_region
        %s137 = sadd.s32 %s15, %s17
        %p138 = scmp.lt.s32.totalorder %s16, 1
        %s139 = scalar_select %p138, %s16, 1
        %p140 = scmp.lt.s32.totalorder %s137, 1
        %s141 = scalar_select %p140, %s137, 1
        %s142 = smul.addr %s139, 2
        %s143 = sadd.s32 %s141, %s142
        %s144 = scalar_lea.vmem %s0, %s143
        %s145 = sadd.s32 %s15, %s17
      $region20: #{proven_dice_loss.1} parent=15 // pred_fallthru
        _
      // Predicated region
      $region21: #{proven_dice_loss.1} parent=15 // pred_check
        %p146 = pneg %p81
      $region22: #{proven_dice_loss.1} parent=15 // pred_check_branch
        %148 = sbr.rel (%p146) target = $region24
      $region23: #{proven_dice_loss.1} parent=15 // pred_region
        %s149 = sadd.s32 %s15, %s17
        %p150 = scmp.lt.s32.totalorder %s16, 1
        %s151 = scalar_select %p150, %s16, 1
        %p152 = scmp.lt.s32.totalorder %s149, 1
        %s153 = scalar_select %p152, %s149, 1
        %s154 = smul.addr %s151, 2
        %s155 = sadd.s32 %s153, %s154
        %s156 = smul.addr %s155, 8
        %s157 = scalar_lea.vmem %s1, %s156
        %s158 = sadd.s32 %s15, %s17
      $region24: #{proven_dice_loss.1} parent=15 // pred_fallthru
        _
    $region16: #{proven_dice_loss.1} parent=5 // pred_fallthru
      _
    %p159 = scmp.le.s32.totalorder 1, %s8
    %p160 = scmp.lt.s32.totalorder %s8, 5
    %p161 = pnand %p159, %p160
    %p162 = pneg %p161
    // Predicated region
    $region25: #{proven_dice_loss.1} parent=5 // pred_check
      _
    $region26: #{proven_dice_loss.1} parent=5 // pred_check_branch
      %164 = sbr.rel (%p161) target = $region28
    $region27: #{proven_dice_loss.1} parent=5 // pred_region
      %s165 = ssub.s32 %s8, 1
      %s166 = sadd.s32 %s18, %s20
      %p167 = scmp.lt.s32.totalorder %s19, 1
      %s168 = scalar_select %p167, %s19, 1
      %p169 = scmp.lt.s32.totalorder %s166, 1
      %s170 = scalar_select %p169, %s166, 1
      %s171 = smul.addr %s168, 2
      %s172 = sadd.s32 %s170, %s171
      %s173 = scalar_lea.vmem %s0, %s172
      %p174 = pneg %p57
      %p175 = pneg %p54
      %s176 = sadd.s32 %s18, %s20
      %p177 = scmp.lt.s32.totalorder %s19, 1
      %s178 = scalar_select %p177, %s19, 1
      %p179 = scmp.lt.s32.totalorder %s176, 1
      %s180 = scalar_select %p179, %s176, 1
      %s181 = smul.addr %s178, 2
      %s182 = sadd.s32 %s180, %s181
      %s183 = smul.addr %s182, 8
      %s184 = scalar_lea.vmem %s1, %s183
      %p185 = pneg %p87
      %p186 = pneg %p84
      %p187 = pneg %p115
      %p188 = pneg %p112
      %p189 = scmp.lt.s32.totalorder %s18, 1
      %s190 = scalar_select %p189, %s18, 1
      %p191 = scmp.lt.s32.totalorder %s19, 1
      %s192 = scalar_select %p191, %s19, 1
      %s193 = smul.addr %s190, 2
      %s194 = sadd.s32 %s192, %s193
      %s195 = smul.addr %s194, 8
      %s196 = scalar_lea.vmem %s2, %s195
      %s197 = sadd.s32 %s18, %s20
      %p198 = scmp.lt.s32.totalorder %s19, 1
      %s199 = scalar_select %p198, %s19, 1
      %p200 = scmp.lt.s32.totalorder %s197, 1
      %s201 = scalar_select %p200, %s197, 1
      %s202 = smul.addr %s199, 2
      %s203 = sadd.s32 %s201, %s202
      %s204 = scalar_lea.vmem %s0, %s203
      %s205 = sadd.s32 %s18, %s20
      %s206 = sadd.s32 %s18, %s20
      %p207 = scmp.lt.s32.totalorder %s19, 1
      %s208 = scalar_select %p207, %s19, 1
      %p209 = scmp.lt.s32.totalorder %s206, 1
      %s210 = scalar_select %p209, %s206, 1
      %s211 = smul.addr %s208, 2
      %s212 = sadd.s32 %s210, %s211
      %s213 = smul.addr %s212, 8
      %s214 = scalar_lea.vmem %s1, %s213
      %s215 = sadd.s32 %s18, %s20
      %p216 = scmp.lt.s32.totalorder %s18, 1
      %s217 = scalar_select %p216, %s18, 1
      %p218 = scmp.lt.s32.totalorder %s19, 1
      %s219 = scalar_select %p218, %s19, 1
      %s220 = smul.addr %s217, 2
      %s221 = sadd.s32 %s219, %s220
      %s222 = smul.addr %s221, 8
      %s223 = scalar_lea.vmem %s2, %s222
      %p224 = scmp.eq.s32.totalorder %s20, 0
      // Predicated region
      $region29: #{proven_dice_loss.1} parent=27 // pred_check
        %p225 = pneg %p224
      $region30: #{proven_dice_loss.1} parent=27 // pred_check_branch
        %227 = sbr.rel (%p225) target = $region32
      $region31: #{proven_dice_loss.1} parent=27 // pred_region
        %228 = vst [vmem:[%s223] sm:$0x3f] 0.0
      $region32: #{proven_dice_loss.1} parent=27 // pred_fallthru
        _
      %v229 = vld [vmem:[%s214] sm:$0x3f]
      %vm230 = vcmask 1045504
      %v231 = vsel %vm230, %v229, -inf
      %v232 = vrot.slane %v231, 4
      %v233 = vmax.f32 %v231, %v232
      %v234 = vrot.slane %v233, 2
      %v235 = vmax.f32 %v233, %v234
      %v236 = vrot.slane %v235, 1
      %v237 = vmax.f32 %v235, %v236
      %v238 = vsub.f32 %v229, %v237
      %v239 = vmul.f32 %v238, 1.442695
      %v240 = vpow.pop %v239
      %v241 = vsel %vm230, %v240, 0.0
      %v242 = vrot.slane %v241, 4
      %v243 = vadd.f32 %v241, %v242
      %v244 = vrot.slane %v243, 2
      %v245 = vadd.f32 %v243, %v244
      %v246 = vrot.slane %v245, 1
      %v247 = vadd.f32 %v245, %v246
      %v248 = vld [vmem:[%s204] sm:$0x1]
      %v249 = vunpack.c.0.s8 %v248
      %vm250 = vcmp.lt.s32.totalorder %v249, 6
      %v251 = vsel %vm250, 1, 0
      %v252 = vcvt.s32.f32 %v251
      %v253 = vrcp.pop %v247
      %v254 = vmul.f32 %v253, %v252
      %v255 = vlaneseq
      %v256 = vshrl.u32 %v255, 7
      %v257 = vsub.s32 0, %v256
      %v258 = vrot.slane %v254, %v257
      %v259 = vmul.f32 %v240, %v258
      %v260 = vlaneseq
      %v261 = vshrl.u32 %v260, 7
      %v262 = vlaneseq
      %v263 = vshrl.u32 %v262, 7
      %v264 = vsub.s32 0, %v263
      %v265 = vrot.slane %v249, %v264
      %vm266 = vcmp.eq.s32.totalorder %v265, %v261
      %v267 = vsel %vm266, 1, 0
      %v268 = vcvt.s32.f32 %v267
      %v269 = vmul.f32 %v259, %v268
      %v270 = vsel %vm230, %v269, 0.0
      %271 = vadd.xlane.f32.xlu0 %v270
      %v272 = vpop.xlane.xlu0 %271
      %v273 = vsel %vm230, %v259, 0.0
      %274 = vadd.xlane.f32.xlu0 %v273
      %v275 = vpop.xlane.xlu0 %274
      %v276 = vsel %vm230, %v268, 0.0
      %277 = vadd.xlane.f32.xlu0 %v276
      %v278 = vpop.xlane.xlu0 %277
      %v279 = vlaneseq
      %v280 = vand.u32 %v279, 127
      %vm281 = vcmp.eq.s32.totalorder %v280, 0
      %v282 = vsel %vm281, %v272, 0.0
      %vm283 = vcmp.eq.s32.totalorder %v280, 1
      %v284 = vsel %vm283, %v275, 0.0
      %v285 = vadd.f32 %v282, %v284
      %vm286 = vcmp.eq.s32.totalorder %v280, 2
      %v287 = vsel %vm286, %v278, 0.0
      %v288 = vadd.f32 %v285, %v287
      %v289 = vld [vmem:[%s223] sm:$0x3f]
      %v290 = vadd.f32 %v289, %v288
      %291 = vst [vmem:[%s223] sm:$0x3f] %v290
      %p292 = scmp.lt.s32.totalorder %s18, 1
      %s293 = scalar_select %p292, %s18, 1
      %p294 = scmp.lt.s32.totalorder %s19, 1
      %s295 = scalar_select %p294, %s19, 1
      %s296 = smul.addr %s293, 2
      %s297 = sadd.s32 %s295, %s296
      %s298 = smul.addr %s297, 8
      %s299 = scalar_lea.vmem %s2, %s298
      // Predicated region
      $region33: #{proven_dice_loss.1} parent=27 // pred_check
        %p300 = pneg %p112
      $region34: #{proven_dice_loss.1} parent=27 // pred_check_branch
        %302 = sbr.rel (%p300) target = $region36
      $region35: #{proven_dice_loss.1} parent=27 // pred_region
        _
      $region36: #{proven_dice_loss.1} parent=27 // pred_fallthru
        _
    $region28: #{proven_dice_loss.1} parent=5 // pred_fallthru
      _
    %p303 = scmp.le.s32.totalorder 2, %s8
    // Predicated region
    $region37: #{proven_dice_loss.1} parent=5 // pred_check
      %p304 = pneg %p303
    $region38: #{proven_dice_loss.1} parent=5 // pred_check_branch
      %306 = sbr.rel (%p304) target = $region40
    $region39: #{proven_dice_loss.1} parent=5 // pred_region
      %s307 = ssub.s32 %s8, 2
      // Predicated region
      $region41: #{proven_dice_loss.1} parent=39 // pred_check
        %p308 = pneg %p118
      $region42: #{proven_dice_loss.1} parent=39 // pred_check_branch
        %310 = sbr.rel (%p308) target = $region44
      $region43: #{proven_dice_loss.1} parent=39 // pred_region
        %p311 = scmp.lt.s32.totalorder %s21, 1
        %s312 = scalar_select %p311, %s21, 1
        %p313 = scmp.lt.s32.totalorder %s22, 1
        %s314 = scalar_select %p313, %s22, 1
        %s315 = smul.addr %s312, 2
        %s316 = sadd.s32 %s314, %s315
        %s317 = smul.addr %s316, 8
        %s318 = scalar_lea.vmem %s2, %s317
      $region44: #{proven_dice_loss.1} parent=39 // pred_fallthru
        _
    $region40: #{proven_dice_loss.1} parent=5 // pred_fallthru
      _
  $region6: #{proven_dice_loss.1} parent=0 // loop_footer
    %s12 = sadd.s32 1, %s8
  $region7: #{proven_dice_loss.1} parent=0 // loop_footer_branch
    %7 = sbr.rel target = $region3
  $region8: #{proven_dice_loss.1} parent=0 // loop_exit
    _

</llo_original>
